<compile_context>
chip_gen: v6e
topology: v6e:2x2x1
jax: 0.10.0
libtpu: 0.0.40
codegen_flags: <defaults>
</compile_context>

<pallas_src>
import functools
import jax
import jax.numpy as jnp
from jax.experimental import pallas as pl
from jax.experimental.pallas import tpu as pltpu


# --------------------------------------------------------------------------------------
# Kernel 1: fused LayerNorm + QKV projection.
#   One wide matmul (tn, D) x (D, 3*H*Dh); result split per head into (B, H, N, Dh)
#   bf16 Q/K/V arrays (per-head slabs contiguous in HBM for kernel 2).
# --------------------------------------------------------------------------------------
def ln_qkv_kernel(x_ref, g_ref, b_ref, w_ref, q_ref, k_ref, v_ref, *,
                  eps, heads, dim_head):
    x = x_ref[...].astype(jnp.float32)                         # (tn, D)
    mean = jnp.mean(x, axis=-1, keepdims=True)
    cen = x - mean
    var = jnp.mean(cen * cen, axis=-1, keepdims=True)
    xn = cen * jax.lax.rsqrt(var + eps)
    xn = (xn * g_ref[0] + b_ref[0]).astype(jnp.bfloat16)       # bf16 MXU operand

    # Wide, lane-dense projection (softmax scale pre-folded into the Q columns of w).
    y = jnp.dot(xn, w_ref[...], preferred_element_type=jnp.float32)
    y = y.astype(jnp.bfloat16)                                  # (tn, 3*H*Dh)

    inner = heads * dim_head
    for h in range(heads):                                      # static, trace-time unrolled
        lo = h * dim_head
        q_ref[h] = y[:, lo:lo + dim_head]
        k_ref[h] = y[:, inner + lo:inner + lo + dim_head]
        v_ref[h] = y[:, 2 * inner + lo:2 * inner + lo + dim_head]


# --------------------------------------------------------------------------------------
# Kernel 2: multi-head attention + output projection.
#   Grid (B, q-tiles).  K/V for all heads are VMEM-resident per batch element; the head
#   loop runs in-kernel; the full score row (tq, N) is materialized in VMEM so a plain
#   (non-online) softmax suffices; per-head results are projected and accumulated into
#   a (tq, D) f32 scratch, written once as a lane-dense tile.
# --------------------------------------------------------------------------------------
def attn_kernel(q_ref, k_ref, v_ref, wo_ref, bo_ref, o_ref, out_s):
    H = q_ref.shape[0]
    out_s[...] = jnp.zeros_like(out_s)

    def one_head(h):
        q = q_ref[h]                                            # (tq, Dh) bf16, pre-scaled
        k = k_ref[h]                                            # (N, Dh)  bf16
        v = v_ref[h]                                            # (N, Dh)  bf16
        # Scores (tq, N): contraction over Dh, f32 accumulation.
        s = jax.lax.dot_general(q, k, (((1,), (1,)), ((), ())),
                                preferred_element_type=jnp.float32)
        m = jnp.max(s, axis=-1, keepdims=True)
        p = jnp.exp(s - m)                                      # f32 on VPU/EUP
        l = jnp.sum(p, axis=-1, keepdims=True)
        o_h = jnp.dot(p.astype(jnp.bfloat16), v,
                      preferred_element_type=jnp.float32)       # (tq, Dh)
        o_h = o_h * pl.reciprocal(l, approx=True)
        # Accumulate this head's contribution to the output projection (width D).
        out_s[...] += jnp.dot(o_h.astype(jnp.bfloat16), wo_ref[h],
                              preferred_element_type=jnp.float32)

    if H <= 8:                      # small head counts: static unrolled loop
        for h in range(H):
            one_head(h)
    else:                           # larger head counts: bounded live ranges
        def body(h, carry):
            one_head(h)
            return carry
        jax.lax.fori_loop(0, H, body, 0)

    o_ref[...] = (out_s[...] + bo_ref[0]).astype(o_ref.dtype)


# --------------------------------------------------------------------------------------
# Wrapper.
# --------------------------------------------------------------------------------------
def attention_forward(x, gamma, beta, w_qkv, w_out, b_out, *, heads, dim_head,
                      eps=1e-5, tn=None, tq=None):
    """x: (B, N, D); w_qkv: (D, 3*H*Dh); w_out: (H*Dh, D); b_out: (D,)."""
    B, N, D = x.shape
    H, Dh = heads, dim_head
    inner = H * Dh
    assert w_qkv.shape == (D, 3 * inner) and w_out.shape == (inner, D)
    scale = Dh ** (-0.5)

    # Host-side weight prep: fold softmax scale into the Q columns, cast to bf16,
    # pre-split the output-projection weight per head.
    w_q, w_k, w_v = jnp.split(w_qkv, 3, axis=-1)
    w_qkv_s = jnp.concatenate([w_q * scale, w_k, w_v], axis=-1).astype(jnp.bfloat16)
    wo_h = w_out.reshape(H, Dh, D).astype(jnp.bfloat16)          # (H, Dh, D)
    bo = b_out.reshape(1, D).astype(jnp.float32)

    if tn is None:
        tn = N if N <= 256 else 256
    if tq is None:
        tq = N if N <= 256 else 256
    assert N % tn == 0 and (tn == N or tn % 8 == 0)
    assert N % tq == 0 and (tq == N or tq % 8 == 0)
    # TODO(synk): real ViT lengths (e.g. N=197) need padding + masking of padded kv rows.

    # ---- Kernel 1: LayerNorm + QKV projection, per-head (B, H, N, Dh) bf16 outputs. ----
    qkv_out_shape = tuple(jax.ShapeDtypeStruct((B, H, N, Dh), jnp.bfloat16)
                          for _ in range(3))
    head_out_spec = pl.BlockSpec((None, H, tn, Dh), lambda b, i: (b, 0, i, 0))
    q_hd, k_hd, v_hd = pl.pallas_call(
        functools.partial(ln_qkv_kernel, eps=eps, heads=H, dim_head=Dh),
        out_shape=qkv_out_shape,
        grid_spec=pltpu.PrefetchScalarGridSpec(
            num_scalar_prefetch=0,
            grid=(B, N // tn),
            in_specs=[
                pl.BlockSpec((None, tn, D), lambda b, i: (b, i, 0)),    # x
                pl.BlockSpec((1, D), lambda b, i: (0, 0)),              # gamma
                pl.BlockSpec((1, D), lambda b, i: (0, 0)),              # beta
                pl.BlockSpec((D, 3 * inner), lambda b, i: (0, 0)),      # W_qkv (resident)
            ],
            out_specs=[head_out_spec, head_out_spec, head_out_spec],
        ),
        compiler_params=pltpu.CompilerParams(
            dimension_semantics=("parallel", "parallel")),
    )(x, gamma.reshape(1, D), beta.reshape(1, D), w_qkv_s)

    # ---- Kernel 2: attention + output projection.  K/V resident per batch element. ----
    out = pl.pallas_call(
        attn_kernel,
        out_shape=jax.ShapeDtypeStruct((B, N, D), x.dtype),
        grid_spec=pltpu.PrefetchScalarGridSpec(
            num_scalar_prefetch=0,
            grid=(B, N // tq),
            in_specs=[
                pl.BlockSpec((None, H, tq, Dh), lambda b, i: (b, 0, i, 0)),  # Q tile
                pl.BlockSpec((None, H, N, Dh), lambda b, i: (b, 0, 0, 0)),   # K (per-b resident)
                pl.BlockSpec((None, H, N, Dh), lambda b, i: (b, 0, 0, 0)),   # V (per-b resident)
                pl.BlockSpec((H, Dh, D), lambda b, i: (0, 0, 0)),            # W_out (resident)
                pl.BlockSpec((1, D), lambda b, i: (0, 0)),                   # b_out
            ],
            out_specs=pl.BlockSpec((None, tq, D), lambda b, i: (b, i, 0)),
            scratch_shapes=[pltpu.VMEM((tq, D), jnp.float32)],               # out-proj acc
        ),
        compiler_params=pltpu.CompilerParams(
            dimension_semantics=("parallel", "parallel")),
    )(q_hd, k_hd, v_hd, wo_h, bo)
    return out


# --------------------------------------------------------------------------------------
# Pure-JAX reference (f32) for validation.
# --------------------------------------------------------------------------------------
def attention_reference(x, gamma, beta, w_qkv, w_out, b_out, *, heads, dim_head, eps=1e-5):
    B, N, D = x.shape
    inner = heads * dim_head
    mean = jnp.mean(x, axis=-1, keepdims=True)
    var = jnp.mean((x - mean) ** 2, axis=-1, keepdims=True)
    xn = (x - mean) / jnp.sqrt(var + eps) * gamma + beta
    qkv = xn @ w_qkv
    q, k, v = jnp.split(qkv, 3, axis=-1)
    def to_heads(t):
        return t.reshape(B, N, heads, dim_head).transpose(0, 2, 1, 3)
    q, k, v = map(to_heads, (q, k, v))
    dots = jnp.einsum('bhnd,bhmd->bhnm', q, k) * (dim_head ** -0.5)
    attn = jax.nn.softmax(dots, axis=-1)
    out = jnp.einsum('bhnm,bhmd->bhnd', attn, v)
    out = out.transpose(0, 2, 1, 3).reshape(B, N, inner)
    return out @ w_out + b_out


if __name__ == "__main__":
    B, N, D = 2, 16, 32
    heads, dim_head = 4, 8
    inner = heads * dim_head

    key = jax.random.PRNGKey(0)
    kx, k1, k2, k3 = jax.random.split(key, 4)

    x = jax.random.normal(kx, (B, N, D), dtype=jnp.float32)
    gamma = jnp.ones((D,), jnp.float32)          # nn.LayerNorm default init
    beta = jnp.zeros((D,), jnp.float32)
    # nn.Linear weights, stored pre-transposed so the kernels compute x @ W.
    w_qkv = jax.random.uniform(k1, (D, 3 * inner), jnp.float32, -0.1, 0.1)
    w_out = jax.random.uniform(k2, (inner, D), jnp.float32, -0.1, 0.1)
    b_out = jax.random.uniform(k3, (D,), jnp.float32, -0.1, 0.1)

    # tn=tq=8 so the small demo exercises multiple row-tiles / q-tiles.
    y = attention_forward(x, gamma, beta, w_qkv, w_out, b_out,
                          heads=heads, dim_head=dim_head, tn=8, tq=8)
    y = jax.block_until_ready(y)

    y_ref = attention_reference(x, gamma, beta, w_qkv, w_out, b_out,
                                heads=heads, dim_head=dim_head)
    assert y.shape == (B, N, D)
    max_err = float(jnp.max(jnp.abs(y - y_ref)))
    # bf16 MXU operands (f32 accumulation) -> tolerance looser than pure-f32.
    assert jnp.allclose(y, y_ref, atol=2e-2, rtol=2e-2), \
        f"mismatch vs reference (max abs err {max_err})"
    print("KERNEL_OK")
</pallas_src>

<mosaic_0001>
module attributes {stable_mosaic.version = 11 : i64} {
  func.func @ln_qkv_kernel(%arg0: i32, %arg1: i32, %arg2: memref<1x8x32xf32, #tpu.memory_space<vmem>>, %arg3: memref<1x32xf32, #tpu.memory_space<vmem>>, %arg4: memref<1x32xf32, #tpu.memory_space<vmem>>, %arg5: memref<32x96xbf16, #tpu.memory_space<vmem>>, %arg6: memref<1x4x8x8xbf16, #tpu.memory_space<vmem>>, %arg7: memref<1x4x8x8xbf16, #tpu.memory_space<vmem>>, %arg8: memref<1x4x8x8xbf16, #tpu.memory_space<vmem>>) attributes {dimension_semantics = [#tpu.dimension_semantics<parallel>, #tpu.dimension_semantics<parallel>], iteration_bounds = array<i64: 2, 2>, scalar_prefetch = 0 : i64, scratch_operands = 0 : i64, tpu.core_type = #tpu.core_type<tc>, window_params = [{transform_indices = @transform_0, window_bounds = array<i64: 1, 8, 32>}, {pipeline_mode = #tpu.pipeline_mode<synchronous>, transform_indices = @transform_1, window_bounds = array<i64: 1, 32>}, {pipeline_mode = #tpu.pipeline_mode<synchronous>, transform_indices = @transform_2, window_bounds = array<i64: 1, 32>}, {pipeline_mode = #tpu.pipeline_mode<synchronous>, transform_indices = @transform_3, window_bounds = array<i64: 32, 96>}, {transform_indices = @transform_4, window_bounds = array<i64: 1, 4, 8, 8>}, {transform_indices = @transform_5, window_bounds = array<i64: 1, 4, 8, 8>}, {transform_indices = @transform_6, window_bounds = array<i64: 1, 4, 8, 8>}]} {
    %c0 = arith.constant 0 : index
    %c0_0 = arith.constant 0 : index
    %c0_1 = arith.constant 0 : index
    %0 = vector.load %arg2[%c0, %c0_0, %c0_1] : memref<1x8x32xf32, #tpu.memory_space<vmem>>, vector<1x8x32xf32>
    %1 = vector.shape_cast %0 : vector<1x8x32xf32> to vector<8x32xf32>
    %cst = arith.constant dense<0.000000e+00> : vector<8xf32>
    %2 = vector.multi_reduction <add>, %1, %cst [1] : vector<8x32xf32> to vector<8xf32>
    %3 = vector.shape_cast %2 : vector<8xf32> to vector<8x1xf32>
    %cst_2 = arith.constant 3.200000e+01 : f32
    %4 = vector.broadcast %cst_2 : f32 to vector<8x1xf32>
    %5 = arith.divf %3, %4 : vector<8x1xf32>
    %6 = vector.broadcast %5 : vector<8x1xf32> to vector<8x32xf32>
    %7 = arith.subf %1, %6 : vector<8x32xf32>
    %8 = arith.mulf %7, %7 : vector<8x32xf32>
    %cst_3 = arith.constant dense<0.000000e+00> : vector<8xf32>
    %9 = vector.multi_reduction <add>, %8, %cst_3 [1] : vector<8x32xf32> to vector<8xf32>
    %10 = vector.shape_cast %9 : vector<8xf32> to vector<8x1xf32>
    %cst_4 = arith.constant 3.200000e+01 : f32
    %11 = vector.broadcast %cst_4 : f32 to vector<8x1xf32>
    %12 = arith.divf %10, %11 : vector<8x1xf32>
    %cst_5 = arith.constant 9.99999974E-6 : f32
    %13 = vector.broadcast %cst_5 : f32 to vector<8x1xf32>
    %14 = arith.addf %12, %13 : vector<8x1xf32>
    %15 = math.rsqrt %14 : vector<8x1xf32>
    %16 = vector.broadcast %15 : vector<8x1xf32> to vector<8x32xf32>
    %17 = arith.mulf %7, %16 : vector<8x32xf32>
    %c0_6 = arith.constant 0 : index
    %c0_7 = arith.constant 0 : index
    %18 = vector.load %arg3[%c0_6, %c0_7] : memref<1x32xf32, #tpu.memory_space<vmem>>, vector<1x32xf32>
    %19 = vector.shape_cast %18 : vector<1x32xf32> to vector<32xf32>
    %20 = vector.shape_cast %19 : vector<32xf32> to vector<1x32xf32>
    %21 = vector.broadcast %20 : vector<1x32xf32> to vector<8x32xf32>
    %22 = arith.mulf %17, %21 : vector<8x32xf32>
    %c0_8 = arith.constant 0 : index
    %c0_9 = arith.constant 0 : index
    %23 = vector.load %arg4[%c0_8, %c0_9] : memref<1x32xf32, #tpu.memory_space<vmem>>, vector<1x32xf32>
    %24 = vector.shape_cast %23 : vector<1x32xf32> to vector<32xf32>
    %25 = vector.shape_cast %24 : vector<32xf32> to vector<1x32xf32>
    %26 = vector.broadcast %25 : vector<1x32xf32> to vector<8x32xf32>
    %27 = arith.addf %22, %26 : vector<8x32xf32>
    %28 = arith.truncf %27 : vector<8x32xf32> to vector<8x32xbf16>
    %c0_10 = arith.constant 0 : index
    %c0_11 = arith.constant 0 : index
    %29 = vector.load %arg5[%c0_10, %c0_11] : memref<32x96xbf16, #tpu.memory_space<vmem>>, vector<32x96xbf16>
    %cst_12 = arith.constant dense<0.000000e+00> : vector<8x96xf32>
    %30 = tpu.matmul %28, %29, %cst_12 {dimension_numbers = #tpu.dot_dimension_numbers<[1], [0], [0], [1], [0, 0, 1, 1], [], []>} : vector<8x32xbf16>, vector<32x96xbf16>, vector<8x96xf32> -> vector<8x96xf32>
    %31 = arith.truncf %30 : vector<8x96xf32> to vector<8x96xbf16>
    %32 = vector.extract_strided_slice %31 {offsets = [0, 0], sizes = [8, 8], strides = [1, 1]} : vector<8x96xbf16> to vector<8x8xbf16>
    %c0_13 = arith.constant 0 : index
    %c0_14 = arith.constant 0 : index
    %c0_15 = arith.constant 0 : index
    %c0_16 = arith.constant 0 : index
    %33 = vector.load %arg6[%c0_13, %c0_14, %c0_15, %c0_16] : memref<1x4x8x8xbf16, #tpu.memory_space<vmem>>, vector<1x1x8x8xbf16>
    %34 = vector.shape_cast %33 : vector<1x1x8x8xbf16> to vector<8x8xbf16>
    %35 = vector.shape_cast %32 : vector<8x8xbf16> to vector<1x1x8x8xbf16>
    tpu.vector_store %arg6[%c0_13, %c0_14, %c0_15, %c0_16], %35 {strides = array<i32>} : memref<1x4x8x8xbf16, #tpu.memory_space<vmem>>, vector<1x1x8x8xbf16>,
    %36 = vector.extract_strided_slice %31 {offsets = [0, 32], sizes = [8, 8], strides = [1, 1]} : vector<8x96xbf16> to vector<8x8xbf16>
    %c0_17 = arith.constant 0 : index
    %c0_18 = arith.constant 0 : index
    %c0_19 = arith.constant 0 : index
    %c0_20 = arith.constant 0 : index
    %37 = vector.load %arg7[%c0_17, %c0_18, %c0_19, %c0_20] : memref<1x4x8x8xbf16, #tpu.memory_space<vmem>>, vector<1x1x8x8xbf16>
    %38 = vector.shape_cast %37 : vector<1x1x8x8xbf16> to vector<8x8xbf16>
    %39 = vector.shape_cast %36 : vector<8x8xbf16> to vector<1x1x8x8xbf16>
    tpu.vector_store %arg7[%c0_17, %c0_18, %c0_19, %c0_20], %39 {strides = array<i32>} : memref<1x4x8x8xbf16, #tpu.memory_space<vmem>>, vector<1x1x8x8xbf16>,
    %40 = vector.extract_strided_slice %31 {offsets = [0, 64], sizes = [8, 8], strides = [1, 1]} : vector<8x96xbf16> to vector<8x8xbf16>
    %c0_21 = arith.constant 0 : index
    %c0_22 = arith.constant 0 : index
    %c0_23 = arith.constant 0 : index
    %c0_24 = arith.constant 0 : index
    %41 = vector.load %arg8[%c0_21, %c0_22, %c0_23, %c0_24] : memref<1x4x8x8xbf16, #tpu.memory_space<vmem>>, vector<1x1x8x8xbf16>
    %42 = vector.shape_cast %41 : vector<1x1x8x8xbf16> to vector<8x8xbf16>
    %43 = vector.shape_cast %40 : vector<8x8xbf16> to vector<1x1x8x8xbf16>
    tpu.vector_store %arg8[%c0_21, %c0_22, %c0_23, %c0_24], %43 {strides = array<i32>} : memref<1x4x8x8xbf16, #tpu.memory_space<vmem>>, vector<1x1x8x8xbf16>,
    %44 = vector.extract_strided_slice %31 {offsets = [0, 8], sizes = [8, 8], strides = [1, 1]} : vector<8x96xbf16> to vector<8x8xbf16>
    %c0_25 = arith.constant 0 : index
    %c1 = arith.constant 1 : index
    %c0_26 = arith.constant 0 : index
    %c0_27 = arith.constant 0 : index
    %45 = vector.load %arg6[%c0_25, %c1, %c0_26, %c0_27] : memref<1x4x8x8xbf16, #tpu.memory_space<vmem>>, vector<1x1x8x8xbf16>
    %46 = vector.shape_cast %45 : vector<1x1x8x8xbf16> to vector<8x8xbf16>
    %47 = vector.shape_cast %44 : vector<8x8xbf16> to vector<1x1x8x8xbf16>
    tpu.vector_store %arg6[%c0_25, %c1, %c0_26, %c0_27], %47 {strides = array<i32>} : memref<1x4x8x8xbf16, #tpu.memory_space<vmem>>, vector<1x1x8x8xbf16>,
    %48 = vector.extract_strided_slice %31 {offsets = [0, 40], sizes = [8, 8], strides = [1, 1]} : vector<8x96xbf16> to vector<8x8xbf16>
    %c0_28 = arith.constant 0 : index
    %c1_29 = arith.constant 1 : index
    %c0_30 = arith.constant 0 : index
    %c0_31 = arith.constant 0 : index
    %49 = vector.load %arg7[%c0_28, %c1_29, %c0_30, %c0_31] : memref<1x4x8x8xbf16, #tpu.memory_space<vmem>>, vector<1x1x8x8xbf16>
    %50 = vector.shape_cast %49 : vector<1x1x8x8xbf16> to vector<8x8xbf16>
    %51 = vector.shape_cast %48 : vector<8x8xbf16> to vector<1x1x8x8xbf16>
    tpu.vector_store %arg7[%c0_28, %c1_29, %c0_30, %c0_31], %51 {strides = array<i32>} : memref<1x4x8x8xbf16, #tpu.memory_space<vmem>>, vector<1x1x8x8xbf16>,
    %52 = vector.extract_strided_slice %31 {offsets = [0, 72], sizes = [8, 8], strides = [1, 1]} : vector<8x96xbf16> to vector<8x8xbf16>
    %c0_32 = arith.constant 0 : index
    %c1_33 = arith.constant 1 : index
    %c0_34 = arith.constant 0 : index
    %c0_35 = arith.constant 0 : index
    %53 = vector.load %arg8[%c0_32, %c1_33, %c0_34, %c0_35] : memref<1x4x8x8xbf16, #tpu.memory_space<vmem>>, vector<1x1x8x8xbf16>
    %54 = vector.shape_cast %53 : vector<1x1x8x8xbf16> to vector<8x8xbf16>
    %55 = vector.shape_cast %52 : vector<8x8xbf16> to vector<1x1x8x8xbf16>
    tpu.vector_store %arg8[%c0_32, %c1_33, %c0_34, %c0_35], %55 {strides = array<i32>} : memref<1x4x8x8xbf16, #tpu.memory_space<vmem>>, vector<1x1x8x8xbf16>,
    %56 = vector.extract_strided_slice %31 {offsets = [0, 16], sizes = [8, 8], strides = [1, 1]} : vector<8x96xbf16> to vector<8x8xbf16>
    %c0_36 = arith.constant 0 : index
    %c2 = arith.constant 2 : index
    %c0_37 = arith.constant 0 : index
    %c0_38 = arith.constant 0 : index
    %57 = vector.load %arg6[%c0_36, %c2, %c0_37, %c0_38] : memref<1x4x8x8xbf16, #tpu.memory_space<vmem>>, vector<1x1x8x8xbf16>
    %58 = vector.shape_cast %57 : vector<1x1x8x8xbf16> to vector<8x8xbf16>
    %59 = vector.shape_cast %56 : vector<8x8xbf16> to vector<1x1x8x8xbf16>
    tpu.vector_store %arg6[%c0_36, %c2, %c0_37, %c0_38], %59 {strides = array<i32>} : memref<1x4x8x8xbf16, #tpu.memory_space<vmem>>, vector<1x1x8x8xbf16>,
    %60 = vector.extract_strided_slice %31 {offsets = [0, 48], sizes = [8, 8], strides = [1, 1]} : vector<8x96xbf16> to vector<8x8xbf16>
    %c0_39 = arith.constant 0 : index
    %c2_40 = arith.constant 2 : index
    %c0_41 = arith.constant 0 : index
    %c0_42 = arith.constant 0 : index
    %61 = vector.load %arg7[%c0_39, %c2_40, %c0_41, %c0_42] : memref<1x4x8x8xbf16, #tpu.memory_space<vmem>>, vector<1x1x8x8xbf16>
    %62 = vector.shape_cast %61 : vector<1x1x8x8xbf16> to vector<8x8xbf16>
    %63 = vector.shape_cast %60 : vector<8x8xbf16> to vector<1x1x8x8xbf16>
    tpu.vector_store %arg7[%c0_39, %c2_40, %c0_41, %c0_42], %63 {strides = array<i32>} : memref<1x4x8x8xbf16, #tpu.memory_space<vmem>>, vector<1x1x8x8xbf16>,
    %64 = vector.extract_strided_slice %31 {offsets = [0, 80], sizes = [8, 8], strides = [1, 1]} : vector<8x96xbf16> to vector<8x8xbf16>
    %c0_43 = arith.constant 0 : index
    %c2_44 = arith.constant 2 : index
    %c0_45 = arith.constant 0 : index
    %c0_46 = arith.constant 0 : index
    %65 = vector.load %arg8[%c0_43, %c2_44, %c0_45, %c0_46] : memref<1x4x8x8xbf16, #tpu.memory_space<vmem>>, vector<1x1x8x8xbf16>
    %66 = vector.shape_cast %65 : vector<1x1x8x8xbf16> to vector<8x8xbf16>
    %67 = vector.shape_cast %64 : vector<8x8xbf16> to vector<1x1x8x8xbf16>
    tpu.vector_store %arg8[%c0_43, %c2_44, %c0_45, %c0_46], %67 {strides = array<i32>} : memref<1x4x8x8xbf16, #tpu.memory_space<vmem>>, vector<1x1x8x8xbf16>,
    %68 = vector.extract_strided_slice %31 {offsets = [0, 24], sizes = [8, 8], strides = [1, 1]} : vector<8x96xbf16> to vector<8x8xbf16>
    %c0_47 = arith.constant 0 : index
    %c3 = arith.constant 3 : index
    %c0_48 = arith.constant 0 : index
    %c0_49 = arith.constant 0 : index
    %69 = vector.load %arg6[%c0_47, %c3, %c0_48, %c0_49] : memref<1x4x8x8xbf16, #tpu.memory_space<vmem>>, vector<1x1x8x8xbf16>
    %70 = vector.shape_cast %69 : vector<1x1x8x8xbf16> to vector<8x8xbf16>
    %71 = vector.shape_cast %68 : vector<8x8xbf16> to vector<1x1x8x8xbf16>
    tpu.vector_store %arg6[%c0_47, %c3, %c0_48, %c0_49], %71 {strides = array<i32>} : memref<1x4x8x8xbf16, #tpu.memory_space<vmem>>, vector<1x1x8x8xbf16>,
    %72 = vector.extract_strided_slice %31 {offsets = [0, 56], sizes = [8, 8], strides = [1, 1]} : vector<8x96xbf16> to vector<8x8xbf16>
    %c0_50 = arith.constant 0 : index
    %c3_51 = arith.constant 3 : index
    %c0_52 = arith.constant 0 : index
    %c0_53 = arith.constant 0 : index
    %73 = vector.load %arg7[%c0_50, %c3_51, %c0_52, %c0_53] : memref<1x4x8x8xbf16, #tpu.memory_space<vmem>>, vector<1x1x8x8xbf16>
    %74 = vector.shape_cast %73 : vector<1x1x8x8xbf16> to vector<8x8xbf16>
    %75 = vector.shape_cast %72 : vector<8x8xbf16> to vector<1x1x8x8xbf16>
    tpu.vector_store %arg7[%c0_50, %c3_51, %c0_52, %c0_53], %75 {strides = array<i32>} : memref<1x4x8x8xbf16, #tpu.memory_space<vmem>>, vector<1x1x8x8xbf16>,
    %76 = vector.extract_strided_slice %31 {offsets = [0, 88], sizes = [8, 8], strides = [1, 1]} : vector<8x96xbf16> to vector<8x8xbf16>
    %c0_54 = arith.constant 0 : index
    %c3_55 = arith.constant 3 : index
    %c0_56 = arith.constant 0 : index
    %c0_57 = arith.constant 0 : index
    %77 = vector.load %arg8[%c0_54, %c3_55, %c0_56, %c0_57] : memref<1x4x8x8xbf16, #tpu.memory_space<vmem>>, vector<1x1x8x8xbf16>
    %78 = vector.shape_cast %77 : vector<1x1x8x8xbf16> to vector<8x8xbf16>
    %79 = vector.shape_cast %76 : vector<8x8xbf16> to vector<1x1x8x8xbf16>
    tpu.vector_store %arg8[%c0_54, %c3_55, %c0_56, %c0_57], %79 {strides = array<i32>} : memref<1x4x8x8xbf16, #tpu.memory_space<vmem>>, vector<1x1x8x8xbf16>,
    return
  }
  func.func @transform_0(%arg0: i32, %arg1: i32) -> (i32, i32, i32) {
    %c0_i32 = arith.constant 0 : i32
    %c0_i32_0 = arith.constant 0 : i32
    return %arg0, %arg1, %c0_i32 : i32, i32, i32
  }
  func.func @transform_1(%arg0: i32, %arg1: i32) -> (i32, i32) {
    %c0_i32 = arith.constant 0 : i32
    %c0_i32_0 = arith.constant 0 : i32
    %c0_i32_1 = arith.constant 0 : i32
    return %c0_i32, %c0_i32_0 : i32, i32
  }
  func.func @transform_2(%arg0: i32, %arg1: i32) -> (i32, i32) {
    %c0_i32 = arith.constant 0 : i32
    %c0_i32_0 = arith.constant 0 : i32
    %c0_i32_1 = arith.constant 0 : i32
    return %c0_i32, %c0_i32_0 : i32, i32
  }
  func.func @transform_3(%arg0: i32, %arg1: i32) -> (i32, i32) {
    %c0_i32 = arith.constant 0 : i32
    %c0_i32_0 = arith.constant 0 : i32
    %c0_i32_1 = arith.constant 0 : i32
    return %c0_i32, %c0_i32_0 : i32, i32
  }
  func.func @transform_4(%arg0: i32, %arg1: i32) -> (i32, i32, i32, i32) {
    %c0_i32 = arith.constant 0 : i32
    %c0_i32_0 = arith.constant 0 : i32
    %c0_i32_1 = arith.constant 0 : i32
    return %arg0, %c0_i32, %arg1, %c0_i32_0 : i32, i32, i32, i32
  }
  func.func @transform_5(%arg0: i32, %arg1: i32) -> (i32, i32, i32, i32) {
    %c0_i32 = arith.constant 0 : i32
    %c0_i32_0 = arith.constant 0 : i32
    %c0_i32_1 = arith.constant 0 : i32
    return %arg0, %c0_i32, %arg1, %c0_i32_0 : i32, i32, i32, i32
  }
  func.func @transform_6(%arg0: i32, %arg1: i32) -> (i32, i32, i32, i32) {
    %c0_i32 = arith.constant 0 : i32
    %c0_i32_0 = arith.constant 0 : i32
    %c0_i32_1 = arith.constant 0 : i32
    return %arg0, %c0_i32, %arg1, %c0_i32_0 : i32, i32, i32, i32
  }
}

</mosaic_0001>

<llo_original>
// kernel: tpu_custom_call.1
$region0: #{tpu_custom_call.1}
  #allocation0 [shape = 'u32[]', space=smem, size = 0x4, offset = 0x4, fixed_abs, tag = 'smem constant byte address 0x4 - core index']
  #allocation1 [shape = 'u32[144,128]{1,0:T(1,128)}', space=vmem, size = 0x12000, scoped, tag = 'internal scratch']
  %s0 = inlined_call_operand.hbm [shape: f32[2,16,32], index: 0, kind: input, shape index: {}]
  %s1 = inlined_call_operand.vmem [shape: f32[1,32], index: 1, kind: input, shape index: {}]
  %s2 = inlined_call_operand.vmem [shape: f32[1,32], index: 2, kind: input, shape index: {}]
  %s3 = inlined_call_operand.hbm [shape: bf16[32,96], index: 3, kind: input, shape index: {}]
  %s4 = inlined_call_operand.vmem [shape: bf16[2,4,16,8], index: 4, kind: output, shape index: {0}]
  %s5 = inlined_call_operand.vmem [shape: bf16[2,4,16,8], index: 5, kind: output, shape index: {1}]
  %s6 = inlined_call_operand.vmem [shape: bf16[2,4,16,8], index: 6, kind: output, shape index: {2}]
  %7 = xla_tuple %s4, %s5, %s6
  %s8 = sld [smem:[#allocation0]]
  $region184: #{tpu_custom_call.1} parent=0
    _
  %s10 = ssub.s32 1, %s8
  %s11 = scalar_select 0, %s10, %s8
  $region1: #{tpu_custom_call.1} parent=0
    #allocation2 [shape = 'u8[8192]{0}', space=vmem, size = 0x2000, scoped, tag = 'input window, operand 0']
    #allocation3 [shape = 's32[2]{0}', space=sflag, size = 0x8, scoped, tag = 'scoped memory for tpu_custom_call.1']
    #allocation4 [shape = 'u8[8192]{0}', space=vmem, size = 0x2000, scoped, tag = 'input window, operand 3, single buffered']
    #allocation5 [shape = 's32[1]{0}', space=sflag, size = 0x4, scoped, tag = 'scoped memory for tpu_custom_call.1']
    #allocation6 [shape = 'u8[16384]{0}', space=vmem, size = 0x4000, scoped, tag = 'output window, operand 0']
    #allocation7 [shape = 'u8[16384]{0}', space=vmem, size = 0x4000, scoped, tag = 'output window, operand 1']
    #allocation8 [shape = 'u8[16384]{0}', space=vmem, size = 0x4000, scoped, tag = 'output window, operand 2']
    %12 = vsyncpa [#allocation3], 0
    %s13 = scalar_lea.sflag [#allocation3], 1
    %14 = vsyncpa %s13, 0
    %15 = vsyncpa [#allocation5], 0
    loop: start=0, step=1, limit=6
    $region2: #{tpu_custom_call.1} parent=1 // loop_pre_header
      _
    $region3: #{tpu_custom_call.1} parent=1 // loop_header
      %s17 = sphi 0, %s21
      %p18 = scmp.ge.s32.totalorder %s17, 6
      %s24 = sphi 0, %s36
      %s25 = sphi 0, %s32
      %s26 = sphi 0, %s24
      %s27 = sphi 0, %s25
      %s28 = sphi 0, %s26
      %s29 = sphi 0, %s27
      %s41 = sphi 0, %s43
      %s44 = sphi 0, %s41
      %s45 = sphi 0, %s44
      %s61 = sphi 0, %s45
      %s65 = sphi 0, %s65
      %s67 = sphi 0, %s65
      %s68 = sphi 0, %s67
      %s82 = sphi 0, %s68
      %s86 = sphi 0, %s86
      %s88 = sphi 0, %s86
      %s89 = sphi 0, %s88
      %s103 = sphi 0, %s89
      %s107 = sphi 0, %s107
      %s109 = sphi 0, %s107
      %s110 = sphi 0, %s109
      %s124 = sphi 0, %s110
      %s132 = sphi 0, %s134
      %s135 = sphi 0, %s132
      %s136 = sphi 0, %s135
      %s152 = sphi 0, %s136
      %s160 = sphi 0, %s162
      %s163 = sphi 0, %s160
      %s164 = sphi 0, %s163
      %s180 = sphi 0, %s164
      %s188 = sphi 0, %s190
      %s191 = sphi 0, %s188
      %s192 = sphi 0, %s191
      %s208 = sphi 0, %s192
    $region4: #{tpu_custom_call.1} parent=1 // loop_header_branch
      %20 = sbr.rel (%p18) target = $region8
    $region5: #{tpu_custom_call.1} parent=1 // loop_body
      %s22 = ssub.s32 %s17, 1
      %s23 = ssub.s32 %s17, 2
      %s30 = sadd.s32 1, %s25
      %p31 = scmp.ge.s32.totalorder %s30, 2
      %s32 = scalar_select %p31, 0, %s30
      %s33 = sadd.s32 1, %s24
      %s34 = scalar_select %p31, %s33, %s24
      %p35 = scmp.ge.s32.totalorder %s34, 2
      %s36 = scalar_select %p35, 0, %s34
      %s37 = ssub.s32 %s24, %s36
      %s38 = ssub.s32 %s25, %s32
      %s39 = sor.u32 %s37, %s38
      %p40 = scmp.eq.s32.totalorder %s39, 0
      %s42 = sadd.s32 %s41, 1
      %s43 = scalar_select %p40, %s41, %s42
      %p46 = pneg %p40
      %p47 = scmp.eq.s32.totalorder %s17, 3
      %p48 = por %p46, %p47
      %p49 = scmp.ne.s32.totalorder %s41, %s44
      %p50 = scmp.eq.s32.totalorder %s17, 0
      %p51 = por %p49, %p50
      %p52 = scmp.ne.s32.totalorder %s41, %s44
      %p53 = scmp.eq.s32.totalorder %s22, 3
      %p54 = por %p52, %p53
      %p55 = scmp.ne.s32.totalorder %s44, %s45
      %p56 = scmp.eq.s32.totalorder %s22, 0
      %p57 = por %p55, %p56
      %p58 = scmp.ne.s32.totalorder %s44, %s45
      %p59 = scmp.eq.s32.totalorder %s23, 3
      %p60 = por %p58, %p59
      %p62 = scmp.ne.s32.totalorder %s45, %s61
      %p63 = scmp.eq.s32.totalorder %s23, 0
      %p64 = por %p62, %p63
      %s66 = sadd.s32 %s65, 1
      %p69 = scmp.eq.s32.totalorder %s17, 3
      %p70 = scmp.ne.s32.totalorder %s65, %s67
      %p71 = scmp.eq.s32.totalorder %s17, 0
      %p72 = por %p70, %p71
      %p73 = scmp.ne.s32.totalorder %s65, %s67
      %p74 = scmp.eq.s32.totalorder %s22, 3
      %p75 = por %p73, %p74
      %p76 = scmp.ne.s32.totalorder %s67, %s68
      %p77 = scmp.eq.s32.totalorder %s22, 0
      %p78 = por %p76, %p77
      %p79 = scmp.ne.s32.totalorder %s67, %s68
      %p80 = scmp.eq.s32.totalorder %s23, 3
      %p81 = por %p79, %p80
      %p83 = scmp.ne.s32.totalorder %s68, %s82
      %p84 = scmp.eq.s32.totalorder %s23, 0
      %p85 = por %p83, %p84
      %s87 = sadd.s32 %s86, 1
      %p90 = scmp.eq.s32.totalorder %s17, 3
      %p91 = scmp.ne.s32.totalorder %s86, %s88
      %p92 = scmp.eq.s32.totalorder %s17, 0
      %p93 = por %p91, %p92
      %p94 = scmp.ne.s32.totalorder %s86, %s88
      %p95 = scmp.eq.s32.totalorder %s22, 3
      %p96 = por %p94, %p95
      %p97 = scmp.ne.s32.totalorder %s88, %s89
      %p98 = scmp.eq.s32.totalorder %s22, 0
      %p99 = por %p97, %p98
      %p100 = scmp.ne.s32.totalorder %s88, %s89
      %p101 = scmp.eq.s32.totalorder %s23, 3
      %p102 = por %p100, %p101
      %p104 = scmp.ne.s32.totalorder %s89, %s103
      %p105 = scmp.eq.s32.totalorder %s23, 0
      %p106 = por %p104, %p105
      %s108 = sadd.s32 %s107, 1
      %p111 = scmp.eq.s32.totalorder %s17, 3
      %p112 = scmp.ne.s32.totalorder %s107, %s109
      %p113 = scmp.eq.s32.totalorder %s17, 0
      %p114 = por %p112, %p113
      %p115 = scmp.ne.s32.totalorder %s107, %s109
      %p116 = scmp.eq.s32.totalorder %s22, 3
      %p117 = por %p115, %p116
      %p118 = scmp.ne.s32.totalorder %s109, %s110
      %p119 = scmp.eq.s32.totalorder %s22, 0
      %p120 = por %p118, %p119
      %p121 = scmp.ne.s32.totalorder %s109, %s110
      %p122 = scmp.eq.s32.totalorder %s23, 3
      %p123 = por %p121, %p122
      %p125 = scmp.ne.s32.totalorder %s110, %s124
      %p126 = scmp.eq.s32.totalorder %s23, 0
      %p127 = por %p125, %p126
      %s128 = ssub.s32 %s24, %s36
      %s129 = ssub.s32 %s25, %s32
      %s130 = sor.u32 %s128, %s129
      %p131 = scmp.eq.s32.totalorder %s130, 0
      %s133 = sadd.s32 %s132, 1
      %s134 = scalar_select %p131, %s132, %s133
      %p137 = pneg %p131
      %p138 = scmp.eq.s32.totalorder %s17, 3
      %p139 = por %p137, %p138
      %p140 = scmp.ne.s32.totalorder %s132, %s135
      %p141 = scmp.eq.s32.totalorder %s17, 0
      %p142 = por %p140, %p141
      %p143 = scmp.ne.s32.totalorder %s132, %s135
      %p144 = scmp.eq.s32.totalorder %s22, 3
      %p145 = por %p143, %p144
      %p146 = scmp.ne.s32.totalorder %s135, %s136
      %p147 = scmp.eq.s32.totalorder %s22, 0
      %p148 = por %p146, %p147
      %p149 = scmp.ne.s32.totalorder %s135, %s136
      %p150 = scmp.eq.s32.totalorder %s23, 3
      %p151 = por %p149, %p150
      %p153 = scmp.ne.s32.totalorder %s136, %s152
      %p154 = scmp.eq.s32.totalorder %s23, 0
      %p155 = por %p153, %p154
      %s156 = ssub.s32 %s24, %s36
      %s157 = ssub.s32 %s25, %s32
      %s158 = sor.u32 %s156, %s157
      %p159 = scmp.eq.s32.totalorder %s158, 0
      %s161 = sadd.s32 %s160, 1
      %s162 = scalar_select %p159, %s160, %s161
      %p165 = pneg %p159
      %p166 = scmp.eq.s32.totalorder %s17, 3
      %p167 = por %p165, %p166
      %p168 = scmp.ne.s32.totalorder %s160, %s163
      %p169 = scmp.eq.s32.totalorder %s17, 0
      %p170 = por %p168, %p169
      %p171 = scmp.ne.s32.totalorder %s160, %s163
      %p172 = scmp.eq.s32.totalorder %s22, 3
      %p173 = por %p171, %p172
      %p174 = scmp.ne.s32.totalorder %s163, %s164
      %p175 = scmp.eq.s32.totalorder %s22, 0
      %p176 = por %p174, %p175
      %p177 = scmp.ne.s32.totalorder %s163, %s164
      %p178 = scmp.eq.s32.totalorder %s23, 3
      %p179 = por %p177, %p178
      %p181 = scmp.ne.s32.totalorder %s164, %s180
      %p182 = scmp.eq.s32.totalorder %s23, 0
      %p183 = por %p181, %p182
      %s184 = ssub.s32 %s24, %s36
      %s185 = ssub.s32 %s25, %s32
      %s186 = sor.u32 %s184, %s185
      %p187 = scmp.eq.s32.totalorder %s186, 0
      %s189 = sadd.s32 %s188, 1
      %s190 = scalar_select %p187, %s188, %s189
      %p193 = pneg %p187
      %p194 = scmp.eq.s32.totalorder %s17, 3
      %p195 = por %p193, %p194
      %p196 = scmp.ne.s32.totalorder %s188, %s191
      %p197 = scmp.eq.s32.totalorder %s17, 0
      %p198 = por %p196, %p197
      %p199 = scmp.ne.s32.totalorder %s188, %s191
      %p200 = scmp.eq.s32.totalorder %s22, 3
      %p201 = por %p199, %p200
      %p202 = scmp.ne.s32.totalorder %s191, %s192
      %p203 = scmp.eq.s32.totalorder %s22, 0
      %p204 = por %p202, %p203
      %p205 = scmp.ne.s32.totalorder %s191, %s192
      %p206 = scmp.eq.s32.totalorder %s23, 3
      %p207 = por %p205, %p206
      %p209 = scmp.ne.s32.totalorder %s192, %s208
      %p210 = scmp.eq.s32.totalorder %s23, 0
      %p211 = por %p209, %p210
      %p212 = scmp.le.s32.totalorder 1, %s17
      %p213 = scmp.lt.s32.totalorder %s17, 5
      %p214 = pnand %p212, %p213
      %p215 = pneg %p214
      // Predicated region
      $region9: #{tpu_custom_call.1} parent=5 // pred_check
        _
      $region10: #{tpu_custom_call.1} parent=5 // pred_check_branch
        %217 = sbr.rel (%p214) target = $region12
      $region11: #{tpu_custom_call.1} parent=5 // pred_region
        %s218 = ssub.s32 %s17, 1
        // Predicated region
        $region13: #{tpu_custom_call.1} parent=11 // pred_check
          %p219 = pneg %p78
        $region14: #{tpu_custom_call.1} parent=11 // pred_check_branch
          %221 = sbr.rel (%p219) target = $region16
        $region15: #{tpu_custom_call.1} parent=11 // pred_region
          _
        $region16: #{tpu_custom_call.1} parent=11 // pred_fallthru
          _
        // Predicated region
        $region17: #{tpu_custom_call.1} parent=11 // pred_check
          %p222 = pneg %p99
        $region18: #{tpu_custom_call.1} parent=11 // pred_check_branch
          %224 = sbr.rel (%p222) target = $region20
        $region19: #{tpu_custom_call.1} parent=11 // pred_region
          _
        $region20: #{tpu_custom_call.1} parent=11 // pred_fallthru
          _
        // Predicated region
        $region21: #{tpu_custom_call.1} parent=11 // pred_check
          %p225 = pneg %p120
        $region22: #{tpu_custom_call.1} parent=11 // pred_check_branch
          %227 = sbr.rel (%p225) target = $region24
        $region23: #{tpu_custom_call.1} parent=11 // pred_region
          %s229 = ssub.s32 256, 256
          %230 = vsyncadd [#allocation5], %s229
          %s231 = sshll.u32 [#allocation4], 4
          %s232 = int_to_ptr.vmem [resolvable:$true] %s231
          %237 = dma.hbm_to_vmem [thread:$0]  %s3, 256, %s232, [#allocation5], 64, 64, 4
        $region24: #{tpu_custom_call.1} parent=11 // pred_fallthru
          _
      $region12: #{tpu_custom_call.1} parent=5 // pred_fallthru
        _
      %p238 = scmp.lt.s32.totalorder %s17, 4
      // Predicated region
      $region25: #{tpu_custom_call.1} parent=5 // pred_check
        %p239 = pneg %p238
      $region26: #{tpu_custom_call.1} parent=5 // pred_check_branch
        %241 = sbr.rel (%p239) target = $region28
      $region27: #{tpu_custom_call.1} parent=5 // pred_region
        // Predicated region
        $region29: #{tpu_custom_call.1} parent=27 // pred_check
          %p242 = pneg %p51
        $region30: #{tpu_custom_call.1} parent=27 // pred_check_branch
          %244 = sbr.rel (%p242) target = $region32
        $region31: #{tpu_custom_call.1} parent=27 // pred_region
          %s245 = sand.u32 %s41, 1
          %s246 = scalar_lea.sflag [#allocation3], %s245
          %s247 = sand.u32 %s41, 1
          %s248 = smul.addr %s247, 8
          %s249 = scalar_lea.vmem [#allocation2], %s248
          %s251 = ssub.s32 128, 128
          %252 = vsyncadd %s246, %s251
          %s253 = smul.addr %s24, 2
          %s254 = sadd.s32 %s25, %s253
          %s255 = smul.addr %s254, 128
          %s256 = scalar_lea.hbm %s0, %s255
          %s258 = sshll.u32 %s249, 4
          %s259 = int_to_ptr.vmem [resolvable:$true] %s258
          %261 = dma.hbm_to_vmem [thread:$0]  %s256, 128, %s259, %s246
        $region32: #{tpu_custom_call.1} parent=27 // pred_fallthru
          _
      $region28: #{tpu_custom_call.1} parent=5 // pred_fallthru
        _
      %p262 = scmp.le.s32.totalorder 1, %s17
      %p263 = scmp.lt.s32.totalorder %s17, 5
      %p264 = pnand %p262, %p263
      %p265 = pneg %p264
      // Predicated region
      $region33: #{tpu_custom_call.1} parent=5 // pred_check
        _
      $region34: #{tpu_custom_call.1} parent=5 // pred_check_branch
        %267 = sbr.rel (%p264) target = $region36
      $region35: #{tpu_custom_call.1} parent=5 // pred_region
        %s268 = ssub.s32 %s17, 1
        %s269 = sand.u32 %s44, 1
        %s270 = scalar_lea.sflag [#allocation3], %s269
        %s271 = sand.u32 %s44, 1
        %s272 = smul.addr %s271, 8
        %s273 = scalar_lea.vmem [#allocation2], %s272
        // Predicated region
        $region37: #{tpu_custom_call.1} parent=35 // pred_check
          %p274 = pneg %p57
        $region38: #{tpu_custom_call.1} parent=35 // pred_check_branch
          %276 = sbr.rel (%p274) target = $region40
        $region39: #{tpu_custom_call.1} parent=35 // pred_region
          %277 = dma.done %s270, 128
        $region40: #{tpu_custom_call.1} parent=35 // pred_fallthru
          _
        // Predicated region
        $region41: #{tpu_custom_call.1} parent=35 // pred_check
          %p278 = pneg %p120
        $region42: #{tpu_custom_call.1} parent=35 // pred_check_branch
          %280 = sbr.rel (%p278) target = $region44
        $region43: #{tpu_custom_call.1} parent=35 // pred_region
          %281 = dma.done [#allocation5], 256
        $region44: #{tpu_custom_call.1} parent=35 // pred_fallthru
          _
        %s282 = sand.u32 %s44, 1
        %s283 = scalar_lea.sflag [#allocation3], %s282
        %s284 = sand.u32 %s44, 1
        %s285 = smul.addr %s284, 8
        %s286 = scalar_lea.vmem [#allocation2], %s285
        %p287 = pneg %p57
        %p288 = pneg %p54
        %p289 = pneg %p78
        %p290 = pneg %p75
        %p291 = pneg %p99
        %p292 = pneg %p96
        %p293 = pneg %p120
        %p294 = pneg %p117
        %p295 = pneg %p148
        %p296 = pneg %p145
        %s297 = sand.u32 %s135, 1
        %s298 = sand.u32 %s135, 1
        %s299 = smul.addr %s298, 16
        %s300 = scalar_lea.vmem [#allocation6], %s299
        %p301 = pneg %p176
        %p302 = pneg %p173
        %s303 = sand.u32 %s163, 1
        %s304 = sand.u32 %s163, 1
        %s305 = smul.addr %s304, 16
        %s306 = scalar_lea.vmem [#allocation7], %s305
        %p307 = pneg %p204
        %p308 = pneg %p201
        %s309 = sand.u32 %s191, 1
        %s310 = sand.u32 %s191, 1
        %s311 = smul.addr %s310, 16
        %s312 = scalar_lea.vmem [#allocation8], %s311
        %v314 = vld [vmem:[%s273] sm:$0xff]
        %vm315 = vcmask 261120
        %v316 = vsel %vm315, %v314, 0.0
        %317 = vadd.xlane.f32.xlu0 %v316
        %v318 = vpop.xlane.xlu0 %317
        %v319 = vrcp.pop 32.0
        %v320 = vmul.f32 %v318, %v319
        %v321 = vsub.f32 %v314, %v320
        %v322 = vmul.f32 %v321, %v321
        %v323 = vsel %vm315, %v322, 0.0
        %324 = vadd.xlane.f32.xlu0 %v323
        %v325 = vpop.xlane.xlu0 %324
        %v326 = vmul.f32 %v325, %v319
        %v327 = vadd.f32 %v326, 1e-05
        %v328 = vrsqrt.pop %v327
        %v329 = vmul.f32 %v321, %v328
        %v330 = vld [vmem:[%s1] sm:$0x1]
        %v332 = vlaneseq
        %v333 = vshrl.u32 %v332, 7
        %v334 = vsub.s32 0, %v333
        %v335 = vrot.slane %v330, %v334
        %v337 = vmul.f32 %v329, %v335
        %v338 = vld [vmem:[%s2] sm:$0x1]
        %v340 = vlaneseq
        %v341 = vshrl.u32 %v340, 7
        %v342 = vsub.s32 0, %v341
        %v343 = vrot.slane %v338, %v342
        %v345 = vadd.f32 %v337, %v343
        %v346 = vpack.c.bf16 %v345, %v345
        %v347 = vld [vmem:[#allocation4] sm:$0xf]
        %v348 = vld [vmem:[#allocation4 + $0x4] sm:$0xf]
        %v349 = vld [vmem:[#allocation4 + $0x8] sm:$0xf]
        %v350 = vld [vmem:[#allocation4 + $0xc] sm:$0xf]
        %v355 = vunpack.c.l.b16 %v347
        %v356 = vunpack.c.l.b16 %v348
        %v357 = vunpack.c.l.b16 %v349
        %v358 = vunpack.c.l.b16 %v350
        %v359 = vpack.c.b16 %v356, %v355
        %v360 = vpack.c.b16 %v358, %v357
        %v364 = vsel %vm315, %v346, 0
        %366 = vmatprep.subr.bf16.mxu0 0
        %367 = vmatpush1.bf16.msra.mxu0 0
        %368 = vmatprep.subr.bf16.mxu0 0
        %369 = vmatpush1.bf16.msra.mxu0 0
        %370 = vmatprep.subr.bf16.mxu0 0
        %371 = vmatpush1.bf16.msra.mxu0 0
        %372 = vmatprep.subr.bf16.mxu0 0
        %373 = vmatpush1.bf16.msra.mxu0 0
        %374 = vmatprep.subr.bf16.mxu0 0
        %375 = vmatpush1.bf16.msra.mxu0 0
        %376 = vmatprep.subr.bf16.mxu0 0
        %377 = vmatpush1.bf16.msra.mxu0 0
        %378 = vmatprep.subr.bf16.mxu0 0
        %379 = vmatpush1.bf16.msra.mxu0 %v360
        %380 = vmatprep.subr.bf16.mxu0 0
        %381 = vmatpush1.bf16.msra.mxu0 %v359
        %382 = vmatprep.subr.bf16.mxu0 0
        %383 = vmatpush2.bf16.msra.mxu0 0
        %384 = vmatprep.subr.bf16.mxu0 0
        %385 = vmatpush2.bf16.msra.mxu0 0
        %386 = vmatprep.subr.bf16.mxu0 0
        %387 = vmatpush2.bf16.msra.mxu0 0
        %388 = vmatprep.subr.bf16.mxu0 0
        %389 = vmatpush2.bf16.msra.mxu0 0
        %390 = vmatprep.subr.bf16.mxu0 0
        %391 = vmatpush2.bf16.msra.mxu0 0
        %392 = vmatprep.subr.bf16.mxu0 0
        %393 = vmatpush2.bf16.msra.mxu0 0
        %394 = vmatprep.subr.bf16.mxu0 0
        %395 = vmatpush2.bf16.msra.mxu0 0
        %396 = vmatprep.subr.bf16.mxu0 0
        %397 = vmatpush2.bf16.msra.mxu0 0
        %398 = vmatprep.mubr.bf16.mxu0 0
        %399 = vmatmul.mubr.bf16.gmra.mxu0 %v364
        %v400 = vpop.f32.mrf.mxu0
        %v401 = vadd.f32 0.0, %v400
        %v402 = vpop.f32.mrf.mxu0
        %v403 = vpop.f32.mrf.mxu0
        %v404 = vpop.f32.mrf.mxu0
        %405 = vdwg.mxu0
        %v406 = vpack.c.bf16 %v401, %v401
        %vm407 = vcmask 60416
        %408 = vst.msk [vmem:[%s300] sm:$0xf] %vm407, %v406
        %v410 = vunpack.c.l.b16 %v406
        %v411 = vpack.c.b16 %v410, %v410
        %412 = vrot.lane.b32.xlu0 %v411, 96
        %v413 = vpop.permute.xlu0 %412
        %415 = vst.msk [vmem:[%s306] sm:$0xf] %vm407, %v413
        %416 = vrot.lane.b32.xlu0 %v411, 64
        %v417 = vpop.permute.xlu0 %416
        %419 = vst.msk [vmem:[%s312] sm:$0xf] %vm407, %v417
        %420 = vrot.lane.b32.xlu0 %v411, 120
        %v421 = vpop.permute.xlu0 %420
        %s423 = scalar_lea.vmem %s300, 4 [#allocation6]
        %424 = vst.msk [vmem:[%s423] sm:$0xf] %vm407, %v421
        %425 = vrot.lane.b32.xlu0 %v411, 88
        %v426 = vpop.permute.xlu0 %425
        %s428 = scalar_lea.vmem %s306, 4 [#allocation7]
        %429 = vst.msk [vmem:[%s428] sm:$0xf] %vm407, %v426
        %430 = vrot.lane.b32.xlu0 %v411, 56
        %v431 = vpop.permute.xlu0 %430
        %s433 = scalar_lea.vmem %s312, 4 [#allocation8]
        %434 = vst.msk [vmem:[%s433] sm:$0xf] %vm407, %v431
        %435 = vrot.lane.b32.xlu0 %v411, 112
        %v436 = vpop.permute.xlu0 %435
        %s438 = scalar_lea.vmem %s300, 8 [#allocation6]
        %439 = vst.msk [vmem:[%s438] sm:$0xf] %vm407, %v436
        %440 = vrot.lane.b32.xlu0 %v411, 80
        %v441 = vpop.permute.xlu0 %440
        %s443 = scalar_lea.vmem %s306, 8 [#allocation7]
        %444 = vst.msk [vmem:[%s443] sm:$0xf] %vm407, %v441
        %445 = vrot.lane.b32.xlu0 %v411, 48
        %v446 = vpop.permute.xlu0 %445
        %s448 = scalar_lea.vmem %s312, 8 [#allocation8]
        %449 = vst.msk [vmem:[%s448] sm:$0xf] %vm407, %v446
        %450 = vrot.lane.b32.xlu0 %v411, 104
        %v451 = vpop.permute.xlu0 %450
        %s453 = scalar_lea.vmem %s300, 12 [#allocation6]
        %454 = vst.msk [vmem:[%s453] sm:$0xf] %vm407, %v451
        %455 = vrot.lane.b32.xlu0 %v411, 72
        %v456 = vpop.permute.xlu0 %455
        %s458 = scalar_lea.vmem %s306, 12 [#allocation7]
        %459 = vst.msk [vmem:[%s458] sm:$0xf] %vm407, %v456
        %460 = vrot.lane.b32.xlu0 %v411, 40
        %v461 = vpop.permute.xlu0 %460
        %s463 = scalar_lea.vmem %s312, 12 [#allocation8]
        %464 = vst.msk [vmem:[%s463] sm:$0xf] %vm407, %v461
        %s465 = sand.u32 %s135, 1
        %s466 = sand.u32 %s135, 1
        %s467 = smul.addr %s466, 16
        %s468 = scalar_lea.vmem [#allocation6], %s467
        %s469 = sand.u32 %s163, 1
        %s470 = sand.u32 %s163, 1
        %s471 = smul.addr %s470, 16
        %s472 = scalar_lea.vmem [#allocation7], %s471
        %s473 = sand.u32 %s191, 1
        %s474 = sand.u32 %s191, 1
        %s475 = smul.addr %s474, 16
        %s476 = scalar_lea.vmem [#allocation8], %s475
        // Predicated region
        $region45: #{tpu_custom_call.1} parent=35 // pred_check
          %p477 = pneg %p145
        $region46: #{tpu_custom_call.1} parent=35 // pred_check_branch
          %479 = sbr.rel (%p477) target = $region48
        $region47: #{tpu_custom_call.1} parent=35 // pred_region
          %s480 = smul.addr %s26, 8
          %s481 = sadd.s32 %s27, %s480
          %s482 = smul.addr %s481, 4
          %s483 = scalar_lea.vmem %s4, %s482
          // Predicated region
          $region49: #{tpu_custom_call.1} parent=47 // pred_check
            _
          $region50: #{tpu_custom_call.1} parent=47 // pred_check_branch
            %485 = sbr.rel (0) target = $region52
          $region51: #{tpu_custom_call.1} parent=47 // pred_region
            // Predicated region
            $region53: #{tpu_custom_call.1} parent=51 // pred_check
              _
            $region54: #{tpu_custom_call.1} parent=51 // pred_check_branch
              %487 = sbr.rel target = $region56
            $region55: #{tpu_custom_call.1} parent=51 // pred_region
              // Predicated region
              $region68: #{tpu_custom_call.1} parent=55 // pred_check
                _
              $region69: #{tpu_custom_call.1} parent=55 // pred_check_branch
                %509 = sbr.rel (0) target = $region71
              $region70: #{tpu_custom_call.1} parent=55 // pred_region
                loop: start=0, step=1, limit=1
                $region72: #{tpu_custom_call.1} parent=70 // loop_pre_header
                  _
                $region73: #{tpu_custom_call.1} parent=70 // loop_header
                  %s511 = sphi 0, %s515
                  %p512 = scmp.ge.s32.totalorder %s511, 1
                  %s516 = sphi %s468, %s468
                  %s517 = sphi %s483, %s483
                $region74: #{tpu_custom_call.1} parent=70 // loop_header_branch
                  %514 = sbr.rel (%p512) target = $region78
                $region75: #{tpu_custom_call.1} parent=70 // loop_body
                  _
                $region76: #{tpu_custom_call.1} parent=70 // loop_footer
                  %s515 = sadd.s32 1, %s511
                $region77: #{tpu_custom_call.1} parent=70 // loop_footer_branch
                  %510 = sbr.rel target = $region73
                $region78: #{tpu_custom_call.1} parent=70 // loop_exit
                  _
                %s519 = ssub.s32 16, 1
                loop: start=0, step=1, limit=1
                $region79: #{tpu_custom_call.1} parent=70 // loop_pre_header
                  _
                $region80: #{tpu_custom_call.1} parent=70 // loop_header
                  %s521 = sphi 0, %s525
                  %p522 = scmp.ge.s32.totalorder %s521, 1
                  %s526 = sphi %s468, %s468
                  %s527 = sphi %s483, %s483
                $region81: #{tpu_custom_call.1} parent=70 // loop_header_branch
                  %524 = sbr.rel (%p522) target = $region85
                $region82: #{tpu_custom_call.1} parent=70 // loop_body
                  %v528 = vld [vmem:[%s526] sm:%s519]
                  %529 = vst [vmem:[%s527] sm:%s519] %v528
                  %v530 = vld [vmem:[%s526 + $0x4] sm:%s519]
                  %531 = vst [vmem:[%s527 + $0x8] sm:%s519] %v530
                  %v532 = vld [vmem:[%s526 + $0x8] sm:%s519]
                  %533 = vst [vmem:[%s527 + $0x10] sm:%s519] %v532
                  %v534 = vld [vmem:[%s526 + $0xc] sm:%s519]
                  %535 = vst [vmem:[%s527 + $0x18] sm:%s519] %v534
                $region83: #{tpu_custom_call.1} parent=70 // loop_footer
                  %s525 = sadd.s32 1, %s521
                $region84: #{tpu_custom_call.1} parent=70 // loop_footer_branch
                  %520 = sbr.rel target = $region80
                $region85: #{tpu_custom_call.1} parent=70 // loop_exit
                  _
              $region71: #{tpu_custom_call.1} parent=55 // pred_fallthru
                _
            $region56: #{tpu_custom_call.1} parent=51 // pred_fallthru
              _
            // Predicated region
            $region57: #{tpu_custom_call.1} parent=51 // pred_check
              _
            $region58: #{tpu_custom_call.1} parent=51 // pred_check_branch
              %489 = sbr.rel (0) target = $region60
            $region59: #{tpu_custom_call.1} parent=51 // pred_region
              %s491 = ssub.s32 16, 1
              loop: start=0, step=1, limit=1
              $region61: #{tpu_custom_call.1} parent=59 // loop_pre_header
                _
              $region62: #{tpu_custom_call.1} parent=59 // loop_header
                %s493 = sphi 0, %s497
                %p494 = scmp.ge.s32.totalorder %s493, 1
                %s498 = sphi %s468, %s468
                %s499 = sphi %s483, %s483
              $region63: #{tpu_custom_call.1} parent=59 // loop_header_branch
                %496 = sbr.rel (%p494) target = $region67
              $region64: #{tpu_custom_call.1} parent=59 // loop_body
                %v500 = vld [vmem:[%s498] sm:%s491]
                %501 = vst [vmem:[%s499] sm:%s491] %v500
                %v502 = vld [vmem:[%s498 + $0x4] sm:%s491]
                %503 = vst [vmem:[%s499 + $0x8] sm:%s491] %v502
                %v504 = vld [vmem:[%s498 + $0x8] sm:%s491]
                %505 = vst [vmem:[%s499 + $0x10] sm:%s491] %v504
                %v506 = vld [vmem:[%s498 + $0xc] sm:%s491]
                %507 = vst [vmem:[%s499 + $0x18] sm:%s491] %v506
              $region65: #{tpu_custom_call.1} parent=59 // loop_footer
                %s497 = sadd.s32 1, %s493
              $region66: #{tpu_custom_call.1} parent=59 // loop_footer_branch
                %492 = sbr.rel target = $region62
              $region67: #{tpu_custom_call.1} parent=59 // loop_exit
                _
            $region60: #{tpu_custom_call.1} parent=51 // pred_fallthru
              _
          $region52: #{tpu_custom_call.1} parent=47 // pred_fallthru
            _
          %536 = vnop
        $region48: #{tpu_custom_call.1} parent=35 // pred_fallthru
          _
        // Predicated region
        $region86: #{tpu_custom_call.1} parent=35 // pred_check
          %p537 = pneg %p173
        $region87: #{tpu_custom_call.1} parent=35 // pred_check_branch
          %539 = sbr.rel (%p537) target = $region89
        $region88: #{tpu_custom_call.1} parent=35 // pred_region
          %s540 = smul.addr %s26, 8
          %s541 = sadd.s32 %s27, %s540
          %s542 = smul.addr %s541, 4
          %s543 = scalar_lea.vmem %s5, %s542
          // Predicated region
          $region90: #{tpu_custom_call.1} parent=88 // pred_check
            _
          $region91: #{tpu_custom_call.1} parent=88 // pred_check_branch
            %545 = sbr.rel (0) target = $region93
          $region92: #{tpu_custom_call.1} parent=88 // pred_region
            // Predicated region
            $region94: #{tpu_custom_call.1} parent=92 // pred_check
              _
            $region95: #{tpu_custom_call.1} parent=92 // pred_check_branch
              %547 = sbr.rel target = $region97
            $region96: #{tpu_custom_call.1} parent=92 // pred_region
              // Predicated region
              $region109: #{tpu_custom_call.1} parent=96 // pred_check
                _
              $region110: #{tpu_custom_call.1} parent=96 // pred_check_branch
                %569 = sbr.rel (0) target = $region112
              $region111: #{tpu_custom_call.1} parent=96 // pred_region
                loop: start=0, step=1, limit=1
                $region113: #{tpu_custom_call.1} parent=111 // loop_pre_header
                  _
                $region114: #{tpu_custom_call.1} parent=111 // loop_header
                  %s571 = sphi 0, %s575
                  %p572 = scmp.ge.s32.totalorder %s571, 1
                  %s576 = sphi %s472, %s472
                  %s577 = sphi %s543, %s543
                $region115: #{tpu_custom_call.1} parent=111 // loop_header_branch
                  %574 = sbr.rel (%p572) target = $region119
                $region116: #{tpu_custom_call.1} parent=111 // loop_body
                  _
                $region117: #{tpu_custom_call.1} parent=111 // loop_footer
                  %s575 = sadd.s32 1, %s571
                $region118: #{tpu_custom_call.1} parent=111 // loop_footer_branch
                  %570 = sbr.rel target = $region114
                $region119: #{tpu_custom_call.1} parent=111 // loop_exit
                  _
                %s579 = ssub.s32 16, 1
                loop: start=0, step=1, limit=1
                $region120: #{tpu_custom_call.1} parent=111 // loop_pre_header
                  _
                $region121: #{tpu_custom_call.1} parent=111 // loop_header
                  %s581 = sphi 0, %s585
                  %p582 = scmp.ge.s32.totalorder %s581, 1
                  %s586 = sphi %s472, %s472
                  %s587 = sphi %s543, %s543
                $region122: #{tpu_custom_call.1} parent=111 // loop_header_branch
                  %584 = sbr.rel (%p582) target = $region126
                $region123: #{tpu_custom_call.1} parent=111 // loop_body
                  %v588 = vld [vmem:[%s586] sm:%s579]
                  %589 = vst [vmem:[%s587] sm:%s579] %v588
                  %v590 = vld [vmem:[%s586 + $0x4] sm:%s579]
                  %591 = vst [vmem:[%s587 + $0x8] sm:%s579] %v590
                  %v592 = vld [vmem:[%s586 + $0x8] sm:%s579]
                  %593 = vst [vmem:[%s587 + $0x10] sm:%s579] %v592
                  %v594 = vld [vmem:[%s586 + $0xc] sm:%s579]
                  %595 = vst [vmem:[%s587 + $0x18] sm:%s579] %v594
                $region124: #{tpu_custom_call.1} parent=111 // loop_footer
                  %s585 = sadd.s32 1, %s581
                $region125: #{tpu_custom_call.1} parent=111 // loop_footer_branch
                  %580 = sbr.rel target = $region121
                $region126: #{tpu_custom_call.1} parent=111 // loop_exit
                  _
              $region112: #{tpu_custom_call.1} parent=96 // pred_fallthru
                _
            $region97: #{tpu_custom_call.1} parent=92 // pred_fallthru
              _
            // Predicated region
            $region98: #{tpu_custom_call.1} parent=92 // pred_check
              _
            $region99: #{tpu_custom_call.1} parent=92 // pred_check_branch
              %549 = sbr.rel (0) target = $region101
            $region100: #{tpu_custom_call.1} parent=92 // pred_region
              %s551 = ssub.s32 16, 1
              loop: start=0, step=1, limit=1
              $region102: #{tpu_custom_call.1} parent=100 // loop_pre_header
                _
              $region103: #{tpu_custom_call.1} parent=100 // loop_header
                %s553 = sphi 0, %s557
                %p554 = scmp.ge.s32.totalorder %s553, 1
                %s558 = sphi %s472, %s472
                %s559 = sphi %s543, %s543
              $region104: #{tpu_custom_call.1} parent=100 // loop_header_branch
                %556 = sbr.rel (%p554) target = $region108
              $region105: #{tpu_custom_call.1} parent=100 // loop_body
                %v560 = vld [vmem:[%s558] sm:%s551]
                %561 = vst [vmem:[%s559] sm:%s551] %v560
                %v562 = vld [vmem:[%s558 + $0x4] sm:%s551]
                %563 = vst [vmem:[%s559 + $0x8] sm:%s551] %v562
                %v564 = vld [vmem:[%s558 + $0x8] sm:%s551]
                %565 = vst [vmem:[%s559 + $0x10] sm:%s551] %v564
                %v566 = vld [vmem:[%s558 + $0xc] sm:%s551]
                %567 = vst [vmem:[%s559 + $0x18] sm:%s551] %v566
              $region106: #{tpu_custom_call.1} parent=100 // loop_footer
                %s557 = sadd.s32 1, %s553
              $region107: #{tpu_custom_call.1} parent=100 // loop_footer_branch
                %552 = sbr.rel target = $region103
              $region108: #{tpu_custom_call.1} parent=100 // loop_exit
                _
            $region101: #{tpu_custom_call.1} parent=92 // pred_fallthru
              _
          $region93: #{tpu_custom_call.1} parent=88 // pred_fallthru
            _
          %596 = vnop
        $region89: #{tpu_custom_call.1} parent=35 // pred_fallthru
          _
        // Predicated region
        $region127: #{tpu_custom_call.1} parent=35 // pred_check
          %p597 = pneg %p201
        $region128: #{tpu_custom_call.1} parent=35 // pred_check_branch
          %599 = sbr.rel (%p597) target = $region130
        $region129: #{tpu_custom_call.1} parent=35 // pred_region
          %s600 = smul.addr %s26, 8
          %s601 = sadd.s32 %s27, %s600
          %s602 = smul.addr %s601, 4
          %s603 = scalar_lea.vmem %s6, %s602
          // Predicated region
          $region131: #{tpu_custom_call.1} parent=129 // pred_check
            _
          $region132: #{tpu_custom_call.1} parent=129 // pred_check_branch
            %605 = sbr.rel (0) target = $region134
          $region133: #{tpu_custom_call.1} parent=129 // pred_region
            // Predicated region
            $region135: #{tpu_custom_call.1} parent=133 // pred_check
              _
            $region136: #{tpu_custom_call.1} parent=133 // pred_check_branch
              %607 = sbr.rel target = $region138
            $region137: #{tpu_custom_call.1} parent=133 // pred_region
              // Predicated region
              $region150: #{tpu_custom_call.1} parent=137 // pred_check
                _
              $region151: #{tpu_custom_call.1} parent=137 // pred_check_branch
                %629 = sbr.rel (0) target = $region153
              $region152: #{tpu_custom_call.1} parent=137 // pred_region
                loop: start=0, step=1, limit=1
                $region154: #{tpu_custom_call.1} parent=152 // loop_pre_header
                  _
                $region155: #{tpu_custom_call.1} parent=152 // loop_header
                  %s631 = sphi 0, %s635
                  %p632 = scmp.ge.s32.totalorder %s631, 1
                  %s636 = sphi %s476, %s476
                  %s637 = sphi %s603, %s603
                $region156: #{tpu_custom_call.1} parent=152 // loop_header_branch
                  %634 = sbr.rel (%p632) target = $region160
                $region157: #{tpu_custom_call.1} parent=152 // loop_body
                  _
                $region158: #{tpu_custom_call.1} parent=152 // loop_footer
                  %s635 = sadd.s32 1, %s631
                $region159: #{tpu_custom_call.1} parent=152 // loop_footer_branch
                  %630 = sbr.rel target = $region155
                $region160: #{tpu_custom_call.1} parent=152 // loop_exit
                  _
                %s639 = ssub.s32 16, 1
                loop: start=0, step=1, limit=1
                $region161: #{tpu_custom_call.1} parent=152 // loop_pre_header
                  _
                $region162: #{tpu_custom_call.1} parent=152 // loop_header
                  %s641 = sphi 0, %s645
                  %p642 = scmp.ge.s32.totalorder %s641, 1
                  %s646 = sphi %s476, %s476
                  %s647 = sphi %s603, %s603
                $region163: #{tpu_custom_call.1} parent=152 // loop_header_branch
                  %644 = sbr.rel (%p642) target = $region167
                $region164: #{tpu_custom_call.1} parent=152 // loop_body
                  %v648 = vld [vmem:[%s646] sm:%s639]
                  %649 = vst [vmem:[%s647] sm:%s639] %v648
                  %v650 = vld [vmem:[%s646 + $0x4] sm:%s639]
                  %651 = vst [vmem:[%s647 + $0x8] sm:%s639] %v650
                  %v652 = vld [vmem:[%s646 + $0x8] sm:%s639]
                  %653 = vst [vmem:[%s647 + $0x10] sm:%s639] %v652
                  %v654 = vld [vmem:[%s646 + $0xc] sm:%s639]
                  %655 = vst [vmem:[%s647 + $0x18] sm:%s639] %v654
                $region165: #{tpu_custom_call.1} parent=152 // loop_footer
                  %s645 = sadd.s32 1, %s641
                $region166: #{tpu_custom_call.1} parent=152 // loop_footer_branch
                  %640 = sbr.rel target = $region162
                $region167: #{tpu_custom_call.1} parent=152 // loop_exit
                  _
              $region153: #{tpu_custom_call.1} parent=137 // pred_fallthru
                _
            $region138: #{tpu_custom_call.1} parent=133 // pred_fallthru
              _
            // Predicated region
            $region139: #{tpu_custom_call.1} parent=133 // pred_check
              _
            $region140: #{tpu_custom_call.1} parent=133 // pred_check_branch
              %609 = sbr.rel (0) target = $region142
            $region141: #{tpu_custom_call.1} parent=133 // pred_region
              %s611 = ssub.s32 16, 1
              loop: start=0, step=1, limit=1
              $region143: #{tpu_custom_call.1} parent=141 // loop_pre_header
                _
              $region144: #{tpu_custom_call.1} parent=141 // loop_header
                %s613 = sphi 0, %s617
                %p614 = scmp.ge.s32.totalorder %s613, 1
                %s618 = sphi %s476, %s476
                %s619 = sphi %s603, %s603
              $region145: #{tpu_custom_call.1} parent=141 // loop_header_branch
                %616 = sbr.rel (%p614) target = $region149
              $region146: #{tpu_custom_call.1} parent=141 // loop_body
                %v620 = vld [vmem:[%s618] sm:%s611]
                %621 = vst [vmem:[%s619] sm:%s611] %v620
                %v622 = vld [vmem:[%s618 + $0x4] sm:%s611]
                %623 = vst [vmem:[%s619 + $0x8] sm:%s611] %v622
                %v624 = vld [vmem:[%s618 + $0x8] sm:%s611]
                %625 = vst [vmem:[%s619 + $0x10] sm:%s611] %v624
                %v626 = vld [vmem:[%s618 + $0xc] sm:%s611]
                %627 = vst [vmem:[%s619 + $0x18] sm:%s611] %v626
              $region147: #{tpu_custom_call.1} parent=141 // loop_footer
                %s617 = sadd.s32 1, %s613
              $region148: #{tpu_custom_call.1} parent=141 // loop_footer_branch
                %612 = sbr.rel target = $region144
              $region149: #{tpu_custom_call.1} parent=141 // loop_exit
                _
            $region142: #{tpu_custom_call.1} parent=133 // pred_fallthru
              _
          $region134: #{tpu_custom_call.1} parent=129 // pred_fallthru
            _
          %656 = vnop
        $region130: #{tpu_custom_call.1} parent=35 // pred_fallthru
          _
      $region36: #{tpu_custom_call.1} parent=5 // pred_fallthru
        _
      %p657 = scmp.le.s32.totalorder 2, %s17
      // Predicated region
      $region168: #{tpu_custom_call.1} parent=5 // pred_check
        %p658 = pneg %p657
      $region169: #{tpu_custom_call.1} parent=5 // pred_check_branch
        %660 = sbr.rel (%p658) target = $region171
      $region170: #{tpu_custom_call.1} parent=5 // pred_region
        %s661 = ssub.s32 %s17, 2
        // Predicated region
        $region172: #{tpu_custom_call.1} parent=170 // pred_check
          %p662 = pneg %p151
        $region173: #{tpu_custom_call.1} parent=170 // pred_check_branch
          %664 = sbr.rel (%p662) target = $region175
        $region174: #{tpu_custom_call.1} parent=170 // pred_region
          %s665 = sand.u32 %s136, 1
          %s666 = sand.u32 %s136, 1
          %s667 = smul.addr %s666, 16
          %s668 = scalar_lea.vmem [#allocation6], %s667
        $region175: #{tpu_custom_call.1} parent=170 // pred_fallthru
          _
        // Predicated region
        $region176: #{tpu_custom_call.1} parent=170 // pred_check
          %p669 = pneg %p179
        $region177: #{tpu_custom_call.1} parent=170 // pred_check_branch
          %671 = sbr.rel (%p669) target = $region179
        $region178: #{tpu_custom_call.1} parent=170 // pred_region
          %s672 = sand.u32 %s164, 1
          %s673 = sand.u32 %s164, 1
          %s674 = smul.addr %s673, 16
          %s675 = scalar_lea.vmem [#allocation7], %s674
        $region179: #{tpu_custom_call.1} parent=170 // pred_fallthru
          _
        // Predicated region
        $region180: #{tpu_custom_call.1} parent=170 // pred_check
          %p676 = pneg %p207
        $region181: #{tpu_custom_call.1} parent=170 // pred_check_branch
          %678 = sbr.rel (%p676) target = $region183
        $region182: #{tpu_custom_call.1} parent=170 // pred_region
          %s679 = sand.u32 %s192, 1
          %s680 = sand.u32 %s192, 1
          %s681 = smul.addr %s680, 16
          %s682 = scalar_lea.vmem [#allocation8], %s681
        $region183: #{tpu_custom_call.1} parent=170 // pred_fallthru
          _
      $region171: #{tpu_custom_call.1} parent=5 // pred_fallthru
        _
    $region6: #{tpu_custom_call.1} parent=1 // loop_footer
      %s21 = sadd.s32 1, %s17
    $region7: #{tpu_custom_call.1} parent=1 // loop_footer_branch
      %16 = sbr.rel target = $region3
    $region8: #{tpu_custom_call.1} parent=1 // loop_exit
      _
    %683 = vsyncpa [#allocation3], 1
    %s684 = scalar_lea.sflag [#allocation3], 1
    %685 = vsyncpa %s684, 1
    %686 = vsyncpa [#allocation5], 1

</llo_original>
